<compile_context>
chip_gen: v5e
topology: v5e:2x2
jax: 0.10.0
libtpu: 0.0.40
codegen_flags: <defaults>
</compile_context>

<pallas_src>
import functools

import jax
import jax.numpy as jnp
from jax.experimental import pallas as pl
from jax.experimental.pallas import tpu as pltpu


def _sublayer_connection_kernel(
    x_ref,        # (TM, H)   input rows (full hidden), resident across column steps
    gamma_ref,    # (1, H)    LayerNorm scale
    beta_ref,     # (1, H)    LayerNorm bias
    w_ref,        # (H, TN)   sublayer weight column tile (bf16)
    b_ref,        # (1, TN)   sublayer bias column tile
    *refs,        # [drop_ref (TM, TN)], o_ref (TM, TN), xnorm_ref scratch (TM, H)
    has_dropout: bool,
    eps: float,
    col_tile: int,
):
    if has_dropout:
        drop_ref, o_ref, xnorm_ref = refs
    else:
        o_ref, xnorm_ref = refs

    j = pl.program_id(1)

    # ---- LayerNorm once per row block; cache bf16 result in VMEM scratch ----
    @pl.when(j == 0)
    def _():
        x = x_ref[...].astype(jnp.float32)                     # (TM, H)
        h = x.shape[-1]
        # one-pass stats: sum and sum-of-squares
        s1 = jnp.sum(x, axis=-1, keepdims=True)                # (TM, 1)
        s2 = jnp.sum(x * x, axis=-1, keepdims=True)            # (TM, 1)
        mean = s1 * (1.0 / h)
        var_unbiased = (s2 - h * mean * mean) * (1.0 / (h - 1))
        var_unbiased = jnp.maximum(var_unbiased, 0.0)
        inv_std = 1.0 / (jnp.sqrt(var_unbiased) + eps)         # per-row scalar
        xn = gamma_ref[...] * ((x - mean) * inv_std) + beta_ref[...]
        xnorm_ref[...] = xn.astype(xnorm_ref.dtype)

    # ---- sublayer: Linear column tile on the MXU (bf16 x bf16 -> f32) ----
    y = jnp.dot(xnorm_ref[...], w_ref[...], preferred_element_type=jnp.float32)
    y = y + b_ref[...].astype(jnp.float32)

    # ---- dropout (inverted, training mode) via precomputed keep/scale mask ----
    if has_dropout:
        y = y * drop_ref[...]

    # ---- residual connection on this column slice ----
    col = j * col_tile                                          # multiple of 128
    x_cols = x_ref[:, pl.ds(col, col_tile)].astype(jnp.float32)
    o_ref[...] = (x_cols + y).astype(o_ref.dtype)


def sublayer_connection(x, gamma, beta, w, b, *, dropout_p=0.1, eps=1e-6,
                        dropout_key=None, row_tile=256, col_tile=512):
    """x: (B, S, H) float32.  Returns (B, S, H)."""
    B, S, H = x.shape
    M = B * S
    row_tile = min(row_tile, M)
    col_tile = min(col_tile, H)
    assert M % row_tile == 0 and row_tile % 8 == 0, "row tile must be 8-aligned and divide B*S"
    assert H % col_tile == 0 and col_tile % 128 == 0, "column tile must be 128-aligned and divide H"

    x2 = x.reshape(M, H)
    gamma2 = gamma.reshape(1, H).astype(jnp.float32)
    beta2 = beta.reshape(1, H).astype(jnp.float32)
    w_bf16 = w.astype(jnp.bfloat16)          # bf16 weights: native MXU dtype, half VMEM
    b2 = b.reshape(1, H).astype(jnp.float32)

    has_dropout = dropout_p > 0.0
    inputs = [x2, gamma2, beta2, w_bf16, b2]
    in_specs = [
        pl.BlockSpec((row_tile, H), lambda i, j: (i, 0)),       # x rows (full hidden)
        pl.BlockSpec((1, H), lambda i, j: (0, 0)),              # gamma
        pl.BlockSpec((1, H), lambda i, j: (0, 0)),              # beta
        pl.BlockSpec((H, col_tile), lambda i, j: (0, j)),       # W column tile
        pl.BlockSpec((1, col_tile), lambda i, j: (0, j)),       # b column tile
    ]
    if has_dropout:
        if dropout_key is None:
            dropout_key = jax.random.PRNGKey(0)
        keep = jax.random.bernoulli(dropout_key, 1.0 - dropout_p, (M, H))
        drop_scale = keep.astype(jnp.float32) * (1.0 / (1.0 - dropout_p))
        inputs.append(drop_scale)
        in_specs.append(pl.BlockSpec((row_tile, col_tile), lambda i, j: (i, j)))

    kernel = functools.partial(
        _sublayer_connection_kernel,
        has_dropout=has_dropout, eps=eps, col_tile=col_tile)

    out2 = pl.pallas_call(
        kernel,
        out_shape=jax.ShapeDtypeStruct((M, H), x.dtype),
        grid_spec=pltpu.PrefetchScalarGridSpec(
            num_scalar_prefetch=0,
            grid=(M // row_tile, H // col_tile),
            in_specs=in_specs,
            out_specs=pl.BlockSpec((row_tile, col_tile), lambda i, j: (i, j)),
            scratch_shapes=[pltpu.VMEM((row_tile, H), jnp.bfloat16)],  # cached x_norm
        ),
        compiler_params=pltpu.CompilerParams(
            # rows are independent -> parallel (v7x dual TensorCore);
            # column axis reuses the x_norm scratch -> arbitrary.
            dimension_semantics=("parallel", "arbitrary")),
    )(*inputs)

    return out2.reshape(B, S, H)


def _reference(x, gamma, beta, w, b, eps=1e-6):
    mean = x.mean(-1, keepdims=True)
    var = ((x - mean) ** 2).sum(-1, keepdims=True) / (x.shape[-1] - 1)
    xn = gamma * (x - mean) / (jnp.sqrt(var) + eps) + beta
    return x + (xn @ w + b)


if __name__ == "__main__":
    B, S, H = 2, 8, 256
    key = jax.random.PRNGKey(0)
    kx, kw, kb, kd = jax.random.split(key, 4)

    x = jax.random.normal(kx, (B, S, H), dtype=jnp.float32)
    gamma = jnp.ones((H,), dtype=jnp.float32)
    beta = jnp.zeros((H,), dtype=jnp.float32)
    w = jax.random.normal(kw, (H, H), dtype=jnp.float32) * 0.02
    b = jax.random.normal(kb, (H,), dtype=jnp.float32) * 0.02

    # Small tiles here only to exercise the 2x2 grid; production defaults are 256/512.
    out_eval = sublayer_connection(x, gamma, beta, w, b, dropout_p=0.0,
                                   row_tile=8, col_tile=128)
    jax.block_until_ready(out_eval)
    ref = _reference(x, gamma, beta, w, b)
    assert out_eval.shape == (B, S, H)
    assert jnp.allclose(out_eval, ref, atol=5e-2, rtol=5e-2), \
        float(jnp.max(jnp.abs(out_eval - ref)))

    out_train = sublayer_connection(x, gamma, beta, w, b, dropout_p=0.1,
                                    dropout_key=kd, row_tile=8, col_tile=128)
    jax.block_until_ready(out_train)
    assert out_train.shape == (B, S, H)
    assert bool(jnp.all(jnp.isfinite(out_train)))

    print("KERNEL_OK")
</pallas_src>

<mosaic_0001>
module attributes {stable_mosaic.version = 11 : i64} {
  func.func @_sublayer_connection_kernel(%arg0: i32, %arg1: i32, %arg2: memref<8x256xf32, #tpu.memory_space<vmem>>, %arg3: memref<1x256xf32, #tpu.memory_space<vmem>>, %arg4: memref<1x256xf32, #tpu.memory_space<vmem>>, %arg5: memref<256x128xbf16, #tpu.memory_space<vmem>>, %arg6: memref<1x128xf32, #tpu.memory_space<vmem>>, %arg7: memref<8x128xf32, #tpu.memory_space<vmem>>, %arg8: memref<8x256xbf16, #tpu.memory_space<vmem>>) attributes {dimension_semantics = [#tpu.dimension_semantics<parallel>, #tpu.dimension_semantics<arbitrary>], iteration_bounds = array<i64: 2, 2>, scalar_prefetch = 0 : i64, scratch_operands = 1 : i64, tpu.core_type = #tpu.core_type<tc>, window_params = [{transform_indices = @transform_0, window_bounds = array<i64: 8, 256>}, {pipeline_mode = #tpu.pipeline_mode<synchronous>, transform_indices = @transform_1, window_bounds = array<i64: 1, 256>}, {pipeline_mode = #tpu.pipeline_mode<synchronous>, transform_indices = @transform_2, window_bounds = array<i64: 1, 256>}, {transform_indices = @transform_3, window_bounds = array<i64: 256, 128>}, {transform_indices = @transform_4, window_bounds = array<i64: 1, 128>}, {transform_indices = @transform_5, window_bounds = array<i64: 8, 128>}]} {
    %c0_i32 = arith.constant 0 : i32
    %0 = arith.cmpi eq, %arg1, %c0_i32 : i32
    %1 = arith.extui %0 : i1 to i32
    %c0_i32_0 = arith.constant 0 : i32
    %2 = arith.cmpi ne, %1, %c0_i32_0 : i32
    scf.if %2 {
      %c0_9 = arith.constant 0 : index
      %c0_10 = arith.constant 0 : index
      %14 = vector.load %arg2[%c0_9, %c0_10] : memref<8x256xf32, #tpu.memory_space<vmem>>, vector<8x256xf32>
      %cst_11 = arith.constant dense<0.000000e+00> : vector<8xf32>
      %15 = vector.multi_reduction <add>, %14, %cst_11 [1] : vector<8x256xf32> to vector<8xf32>
      %16 = vector.shape_cast %15 : vector<8xf32> to vector<8x1xf32>
      %17 = arith.mulf %14, %14 : vector<8x256xf32>
      %cst_12 = arith.constant dense<0.000000e+00> : vector<8xf32>
      %18 = vector.multi_reduction <add>, %17, %cst_12 [1] : vector<8x256xf32> to vector<8xf32>
      %19 = vector.shape_cast %18 : vector<8xf32> to vector<8x1xf32>
      %cst_13 = arith.constant 3.906250e-03 : f32
      %20 = vector.broadcast %cst_13 : f32 to vector<8x1xf32>
      %21 = arith.mulf %16, %20 : vector<8x1xf32>
      %cst_14 = arith.constant 2.560000e+02 : f32
      %22 = vector.broadcast %cst_14 : f32 to vector<8x1xf32>
      %23 = arith.mulf %22, %21 : vector<8x1xf32>
      %24 = arith.mulf %23, %21 : vector<8x1xf32>
      %25 = arith.subf %19, %24 : vector<8x1xf32>
      %cst_15 = arith.constant 0.00392156886 : f32
      %26 = vector.broadcast %cst_15 : f32 to vector<8x1xf32>
      %27 = arith.mulf %25, %26 : vector<8x1xf32>
      %cst_16 = arith.constant 0.000000e+00 : f32
      %28 = vector.broadcast %cst_16 : f32 to vector<8x1xf32>
      %29 = arith.maximumf %27, %28 : vector<8x1xf32>
      %30 = math.sqrt %29 : vector<8x1xf32>
      %cst_17 = arith.constant 9.99999997E-7 : f32
      %31 = vector.broadcast %cst_17 : f32 to vector<8x1xf32>
      %32 = arith.addf %30, %31 : vector<8x1xf32>
      %cst_18 = arith.constant 1.000000e+00 : f32
      %33 = vector.broadcast %cst_18 : f32 to vector<8x1xf32>
      %34 = arith.divf %33, %32 : vector<8x1xf32>
      %c0_19 = arith.constant 0 : index
      %c0_20 = arith.constant 0 : index
      %35 = vector.load %arg3[%c0_19, %c0_20] : memref<1x256xf32, #tpu.memory_space<vmem>>, vector<1x256xf32>
      %36 = vector.broadcast %21 : vector<8x1xf32> to vector<8x256xf32>
      %37 = arith.subf %14, %36 : vector<8x256xf32>
      %38 = vector.broadcast %34 : vector<8x1xf32> to vector<8x256xf32>
      %39 = arith.mulf %37, %38 : vector<8x256xf32>
      %40 = vector.broadcast %35 : vector<1x256xf32> to vector<8x256xf32>
      %41 = arith.mulf %40, %39 : vector<8x256xf32>
      %c0_21 = arith.constant 0 : index
      %c0_22 = arith.constant 0 : index
      %42 = vector.load %arg4[%c0_21, %c0_22] : memref<1x256xf32, #tpu.memory_space<vmem>>, vector<1x256xf32>
      %43 = vector.broadcast %42 : vector<1x256xf32> to vector<8x256xf32>
      %44 = arith.addf %41, %43 : vector<8x256xf32>
      %45 = arith.truncf %44 : vector<8x256xf32> to vector<8x256xbf16>
      %c0_23 = arith.constant 0 : index
      %c0_24 = arith.constant 0 : index
      %46 = vector.load %arg8[%c0_23, %c0_24] : memref<8x256xbf16, #tpu.memory_space<vmem>>, vector<8x256xbf16>
      tpu.vector_store %arg8[%c0_23, %c0_24], %45 {strides = array<i32>} : memref<8x256xbf16, #tpu.memory_space<vmem>>, vector<8x256xbf16>,
    } else {
    }
    %c0 = arith.constant 0 : index
    %c0_1 = arith.constant 0 : index
    %3 = vector.load %arg8[%c0, %c0_1] : memref<8x256xbf16, #tpu.memory_space<vmem>>, vector<8x256xbf16>
    %c0_2 = arith.constant 0 : index
    %c0_3 = arith.constant 0 : index
    %4 = vector.load %arg5[%c0_2, %c0_3] : memref<256x128xbf16, #tpu.memory_space<vmem>>, vector<256x128xbf16>
    %cst = arith.constant dense<0.000000e+00> : vector<8x128xf32>
    %5 = tpu.matmul %3, %4, %cst {dimension_numbers = #tpu.dot_dimension_numbers<[1], [0], [0], [1], [0, 0, 1, 1], [], []>} : vector<8x256xbf16>, vector<256x128xbf16>, vector<8x128xf32> -> vector<8x128xf32>
    %c0_4 = arith.constant 0 : index
    %c0_5 = arith.constant 0 : index
    %6 = vector.load %arg6[%c0_4, %c0_5] : memref<1x128xf32, #tpu.memory_space<vmem>>, vector<1x128xf32>
    %7 = vector.broadcast %6 : vector<1x128xf32> to vector<8x128xf32>
    %8 = arith.addf %5, %7 : vector<8x128xf32>
    %c128_i32 = arith.constant 128 : i32
    %9 = arith.muli %arg1, %c128_i32 : i32
    %c0_6 = arith.constant 0 : index
    %10 = arith.index_cast %9 : i32 to index
    %11 = vector.load %arg2[%c0_6, %10] : memref<8x256xf32, #tpu.memory_space<vmem>>, vector<8x128xf32>
    %12 = arith.addf %11, %8 : vector<8x128xf32>
    %c0_7 = arith.constant 0 : index
    %c0_8 = arith.constant 0 : index
    %13 = vector.load %arg7[%c0_7, %c0_8] : memref<8x128xf32, #tpu.memory_space<vmem>>, vector<8x128xf32>
    tpu.vector_store %arg7[%c0_7, %c0_8], %12 {strides = array<i32>} : memref<8x128xf32, #tpu.memory_space<vmem>>, vector<8x128xf32>,
    return
  }
  func.func @transform_0(%arg0: i32, %arg1: i32) -> (i32, i32) {
    %c0_i32 = arith.constant 0 : i32
    %c0_i32_0 = arith.constant 0 : i32
    return %arg0, %c0_i32 : i32, i32
  }
  func.func @transform_1(%arg0: i32, %arg1: i32) -> (i32, i32) {
    %c0_i32 = arith.constant 0 : i32
    %c0_i32_0 = arith.constant 0 : i32
    %c0_i32_1 = arith.constant 0 : i32
    return %c0_i32, %c0_i32_0 : i32, i32
  }
  func.func @transform_2(%arg0: i32, %arg1: i32) -> (i32, i32) {
    %c0_i32 = arith.constant 0 : i32
    %c0_i32_0 = arith.constant 0 : i32
    %c0_i32_1 = arith.constant 0 : i32
    return %c0_i32, %c0_i32_0 : i32, i32
  }
  func.func @transform_3(%arg0: i32, %arg1: i32) -> (i32, i32) {
    %c0_i32 = arith.constant 0 : i32
    %c0_i32_0 = arith.constant 0 : i32
    return %c0_i32, %arg1 : i32, i32
  }
  func.func @transform_4(%arg0: i32, %arg1: i32) -> (i32, i32) {
    %c0_i32 = arith.constant 0 : i32
    %c0_i32_0 = arith.constant 0 : i32
    return %c0_i32, %arg1 : i32, i32
  }
  func.func @transform_5(%arg0: i32, %arg1: i32) -> (i32, i32) {
    %c0_i32 = arith.constant 0 : i32
    return %arg0, %arg1 : i32, i32
  }
}

</mosaic_0001>

<llo_original>
// kernel: tpu_custom_call.1
$region0: #{tpu_custom_call.1}
  #allocation0 [shape = 'u32[]', space=smem, size = 0x4, offset = 0x4, fixed_abs, tag = 'smem constant byte address 0x4 - core index']
  #allocation1 [shape = 'u32[72,128]{1,0:T(1,128)}', space=vmem, size = 0x9000, scoped, tag = 'internal scratch']
  #allocation2 [shape = 'bf16[8,256]{1,0:T(8,128)(2,1)}', space=vmem, size = 0x1000, scoped, tag = 'scratch operand']
  %s0 = inlined_call_operand.hbm [shape: f32[16,256], index: 0, kind: input, shape index: {}]
  %s1 = inlined_call_operand.hbm [shape: f32[1,256], index: 1, kind: input, shape index: {}]
  %s2 = inlined_call_operand.hbm [shape: f32[1,256], index: 2, kind: input, shape index: {}]
  %s3 = inlined_call_operand.hbm [shape: bf16[256,256], index: 3, kind: input, shape index: {}]
  %s4 = inlined_call_operand.vmem [shape: f32[1,256], index: 4, kind: input, shape index: {}]
  %s5 = inlined_call_operand.hbm [shape: f32[16,256], index: 5, kind: output, shape index: {}]
  %s6 = sld [smem:[#allocation0]]
  $region73: #{tpu_custom_call.1} parent=0
    _
  %s8 = ssub.s32 1, %s6
  %s9 = scalar_select 0, %s8, %s6
  $region1: #{tpu_custom_call.1} parent=0
    #allocation3 [shape = 'u8[16384]{0}', space=vmem, size = 0x4000, scoped, tag = 'input window, operand 0']
    #allocation4 [shape = 's32[2]{0}', space=sflag, size = 0x8, scoped, tag = 'scoped memory for tpu_custom_call.1']
    #allocation5 [shape = 's32[2]{0}', space=sflag, size = 0x8, scoped, tag = 'scoped memory for tpu_custom_call.1']
    #allocation6 [shape = 'u8[1024]{0}', space=vmem, size = 0x400, scoped, tag = 'input window, operand 1, single buffered']
    #allocation7 [shape = 's32[1]{0}', space=sflag, size = 0x4, scoped, tag = 'scoped memory for tpu_custom_call.1']
    #allocation8 [shape = 'u8[1024]{0}', space=vmem, size = 0x400, scoped, tag = 'input window, operand 2, single buffered']
    #allocation9 [shape = 'u8[131072]{0}', space=vmem, size = 0x20000, scoped, tag = 'input window, operand 3']
    #allocation10 [shape = 's32[2]{0}', space=sflag, size = 0x8, scoped, tag = 'scoped memory for tpu_custom_call.1']
    #allocation11 [shape = 'u8[8192]{0}', space=vmem, size = 0x2000, scoped, tag = 'output window, operand 0']
    %10 = vsyncpa [#allocation4], 0
    %s11 = scalar_lea.sflag [#allocation4], 1
    %12 = vsyncpa %s11, 0
    %13 = vsyncpa [#allocation7], 0
    %14 = vsyncpa [#allocation10], 0
    %s15 = scalar_lea.sflag [#allocation10], 1
    %16 = vsyncpa %s15, 0
    %17 = vsyncpa [#allocation5], 0
    %s18 = scalar_lea.sflag [#allocation5], 1
    %19 = vsyncpa %s18, 0
    loop: start=0, step=1, limit=6
    $region2: #{tpu_custom_call.1} parent=1 // loop_pre_header
      _
    $region3: #{tpu_custom_call.1} parent=1 // loop_header
      %s21 = sphi 0, %s25
      %p22 = scmp.ge.s32.totalorder %s21, 6
      %s28 = sphi 0, %s40
      %s29 = sphi 0, %s36
      %s30 = sphi 0, %s28
      %s31 = sphi 0, %s29
      %s32 = sphi 0, %s30
      %s33 = sphi 0, %s31
      %s43 = sphi 0, %s45
      %s46 = sphi 0, %s43
      %s47 = sphi 0, %s46
      %s63 = sphi 0, %s47
      %s67 = sphi 0, %s67
      %s69 = sphi 0, %s67
      %s70 = sphi 0, %s69
      %s84 = sphi 0, %s70
      %s88 = sphi 0, %s88
      %s90 = sphi 0, %s88
      %s91 = sphi 0, %s90
      %s105 = sphi 0, %s91
      %s111 = sphi 0, %s113
      %s114 = sphi 0, %s111
      %s115 = sphi 0, %s114
      %s131 = sphi 0, %s115
      %s137 = sphi 0, %s139
      %s140 = sphi 0, %s137
      %s141 = sphi 0, %s140
      %s157 = sphi 0, %s141
      %s165 = sphi 0, %s167
      %s168 = sphi 0, %s165
      %s169 = sphi 0, %s168
      %s185 = sphi 0, %s169
    $region4: #{tpu_custom_call.1} parent=1 // loop_header_branch
      %24 = sbr.rel (%p22) target = $region8
    $region5: #{tpu_custom_call.1} parent=1 // loop_body
      %s26 = ssub.s32 %s21, 1
      %s27 = ssub.s32 %s21, 2
      %s34 = sadd.s32 1, %s29
      %p35 = scmp.ge.s32.totalorder %s34, 2
      %s36 = scalar_select %p35, 0, %s34
      %s37 = sadd.s32 1, %s28
      %s38 = scalar_select %p35, %s37, %s28
      %p39 = scmp.ge.s32.totalorder %s38, 2
      %s40 = scalar_select %p39, 0, %s38
      %s41 = ssub.s32 %s28, %s40
      %p42 = scmp.eq.s32.totalorder %s41, 0
      %s44 = sadd.s32 %s43, 1
      %s45 = scalar_select %p42, %s43, %s44
      %p48 = pneg %p42
      %p49 = scmp.eq.s32.totalorder %s21, 3
      %p50 = por %p48, %p49
      %p51 = scmp.ne.s32.totalorder %s43, %s46
      %p52 = scmp.eq.s32.totalorder %s21, 0
      %p53 = por %p51, %p52
      %p54 = scmp.ne.s32.totalorder %s43, %s46
      %p55 = scmp.eq.s32.totalorder %s26, 3
      %p56 = por %p54, %p55
      %p57 = scmp.ne.s32.totalorder %s46, %s47
      %p58 = scmp.eq.s32.totalorder %s26, 0
      %p59 = por %p57, %p58
      %p60 = scmp.ne.s32.totalorder %s46, %s47
      %p61 = scmp.eq.s32.totalorder %s27, 3
      %p62 = por %p60, %p61
      %p64 = scmp.ne.s32.totalorder %s47, %s63
      %p65 = scmp.eq.s32.totalorder %s27, 0
      %p66 = por %p64, %p65
      %s68 = sadd.s32 %s67, 1
      %p71 = scmp.eq.s32.totalorder %s21, 3
      %p72 = scmp.ne.s32.totalorder %s67, %s69
      %p73 = scmp.eq.s32.totalorder %s21, 0
      %p74 = por %p72, %p73
      %p75 = scmp.ne.s32.totalorder %s67, %s69
      %p76 = scmp.eq.s32.totalorder %s26, 3
      %p77 = por %p75, %p76
      %p78 = scmp.ne.s32.totalorder %s69, %s70
      %p79 = scmp.eq.s32.totalorder %s26, 0
      %p80 = por %p78, %p79
      %p81 = scmp.ne.s32.totalorder %s69, %s70
      %p82 = scmp.eq.s32.totalorder %s27, 3
      %p83 = por %p81, %p82
      %p85 = scmp.ne.s32.totalorder %s70, %s84
      %p86 = scmp.eq.s32.totalorder %s27, 0
      %p87 = por %p85, %p86
      %s89 = sadd.s32 %s88, 1
      %p92 = scmp.eq.s32.totalorder %s21, 3
      %p93 = scmp.ne.s32.totalorder %s88, %s90
      %p94 = scmp.eq.s32.totalorder %s21, 0
      %p95 = por %p93, %p94
      %p96 = scmp.ne.s32.totalorder %s88, %s90
      %p97 = scmp.eq.s32.totalorder %s26, 3
      %p98 = por %p96, %p97
      %p99 = scmp.ne.s32.totalorder %s90, %s91
      %p100 = scmp.eq.s32.totalorder %s26, 0
      %p101 = por %p99, %p100
      %p102 = scmp.ne.s32.totalorder %s90, %s91
      %p103 = scmp.eq.s32.totalorder %s27, 3
      %p104 = por %p102, %p103
      %p106 = scmp.ne.s32.totalorder %s91, %s105
      %p107 = scmp.eq.s32.totalorder %s27, 0
      %p108 = por %p106, %p107
      %s109 = ssub.s32 %s29, %s36
      %p110 = scmp.eq.s32.totalorder %s109, 0
      %s112 = sadd.s32 %s111, 1
      %s113 = scalar_select %p110, %s111, %s112
      %p116 = pneg %p110
      %p117 = scmp.eq.s32.totalorder %s21, 3
      %p118 = por %p116, %p117
      %p119 = scmp.ne.s32.totalorder %s111, %s114
      %p120 = scmp.eq.s32.totalorder %s21, 0
      %p121 = por %p119, %p120
      %p122 = scmp.ne.s32.totalorder %s111, %s114
      %p123 = scmp.eq.s32.totalorder %s26, 3
      %p124 = por %p122, %p123
      %p125 = scmp.ne.s32.totalorder %s114, %s115
      %p126 = scmp.eq.s32.totalorder %s26, 0
      %p127 = por %p125, %p126
      %p128 = scmp.ne.s32.totalorder %s114, %s115
      %p129 = scmp.eq.s32.totalorder %s27, 3
      %p130 = por %p128, %p129
      %p132 = scmp.ne.s32.totalorder %s115, %s131
      %p133 = scmp.eq.s32.totalorder %s27, 0
      %p134 = por %p132, %p133
      %s135 = ssub.s32 %s29, %s36
      %p136 = scmp.eq.s32.totalorder %s135, 0
      %s138 = sadd.s32 %s137, 1
      %s139 = scalar_select %p136, %s137, %s138
      %p142 = pneg %p136
      %p143 = scmp.eq.s32.totalorder %s21, 3
      %p144 = por %p142, %p143
      %p145 = scmp.ne.s32.totalorder %s137, %s140
      %p146 = scmp.eq.s32.totalorder %s21, 0
      %p147 = por %p145, %p146
      %p148 = scmp.ne.s32.totalorder %s137, %s140
      %p149 = scmp.eq.s32.totalorder %s26, 3
      %p150 = por %p148, %p149
      %p151 = scmp.ne.s32.totalorder %s140, %s141
      %p152 = scmp.eq.s32.totalorder %s26, 0
      %p153 = por %p151, %p152
      %p154 = scmp.ne.s32.totalorder %s140, %s141
      %p155 = scmp.eq.s32.totalorder %s27, 3
      %p156 = por %p154, %p155
      %p158 = scmp.ne.s32.totalorder %s141, %s157
      %p159 = scmp.eq.s32.totalorder %s27, 0
      %p160 = por %p158, %p159
      %s161 = ssub.s32 %s28, %s40
      %s162 = ssub.s32 %s29, %s36
      %s163 = sor.u32 %s161, %s162
      %p164 = scmp.eq.s32.totalorder %s163, 0
      %s166 = sadd.s32 %s165, 1
      %s167 = scalar_select %p164, %s165, %s166
      %p170 = pneg %p164
      %p171 = scmp.eq.s32.totalorder %s21, 3
      %p172 = por %p170, %p171
      %p173 = scmp.ne.s32.totalorder %s165, %s168
      %p174 = scmp.eq.s32.totalorder %s21, 0
      %p175 = por %p173, %p174
      %p176 = scmp.ne.s32.totalorder %s165, %s168
      %p177 = scmp.eq.s32.totalorder %s26, 3
      %p178 = por %p176, %p177
      %p179 = scmp.ne.s32.totalorder %s168, %s169
      %p180 = scmp.eq.s32.totalorder %s26, 0
      %p181 = por %p179, %p180
      %p182 = scmp.ne.s32.totalorder %s168, %s169
      %p183 = scmp.eq.s32.totalorder %s27, 3
      %p184 = por %p182, %p183
      %p186 = scmp.ne.s32.totalorder %s169, %s185
      %p187 = scmp.eq.s32.totalorder %s27, 0
      %p188 = por %p186, %p187
      %p189 = scmp.le.s32.totalorder 1, %s21
      %p190 = scmp.lt.s32.totalorder %s21, 5
      %p191 = pnand %p189, %p190
      %p192 = pneg %p191
      // Predicated region
      $region9: #{tpu_custom_call.1} parent=5 // pred_check
        _
      $region10: #{tpu_custom_call.1} parent=5 // pred_check_branch
        %194 = sbr.rel (%p191) target = $region12
      $region11: #{tpu_custom_call.1} parent=5 // pred_region
        %s195 = ssub.s32 %s21, 1
        // Predicated region
        $region13: #{tpu_custom_call.1} parent=11 // pred_check
          %p196 = pneg %p80
        $region14: #{tpu_custom_call.1} parent=11 // pred_check_branch
          %198 = sbr.rel (%p196) target = $region16
        $region15: #{tpu_custom_call.1} parent=11 // pred_region
          %200 = vsyncadd [#allocation7], 0
          %s202 = sshll.u32 %s1, 4
          %s203 = int_to_ptr.hbm [resolvable:$true] %s202
          %s204 = sshll.u32 [#allocation6], 4
          %s205 = int_to_ptr.vmem [resolvable:$true] %s204
          %207 = dma.hbm_to_vmem [thread:$0]  %s203, 32, %s205, [#allocation7]
        $region16: #{tpu_custom_call.1} parent=11 // pred_fallthru
          _
        // Predicated region
        $region17: #{tpu_custom_call.1} parent=11 // pred_check
          %p208 = pneg %p101
        $region18: #{tpu_custom_call.1} parent=11 // pred_check_branch
          %210 = sbr.rel (%p208) target = $region20
        $region19: #{tpu_custom_call.1} parent=11 // pred_region
          %212 = vsyncadd [#allocation7], 0
          %s214 = sshll.u32 %s2, 4
          %s215 = int_to_ptr.hbm [resolvable:$true] %s214
          %s216 = sshll.u32 [#allocation8], 4
          %s217 = int_to_ptr.vmem [resolvable:$true] %s216
          %219 = dma.hbm_to_vmem [thread:$0]  %s215, 32, %s217, [#allocation7]
        $region20: #{tpu_custom_call.1} parent=11 // pred_fallthru
          _
      $region12: #{tpu_custom_call.1} parent=5 // pred_fallthru
        _
      %p220 = scmp.lt.s32.totalorder %s21, 4
      // Predicated region
      $region21: #{tpu_custom_call.1} parent=5 // pred_check
        %p221 = pneg %p220
      $region22: #{tpu_custom_call.1} parent=5 // pred_check_branch
        %223 = sbr.rel (%p221) target = $region24
      $region23: #{tpu_custom_call.1} parent=5 // pred_region
        // Predicated region
        $region25: #{tpu_custom_call.1} parent=23 // pred_check
          %p224 = pneg %p53
        $region26: #{tpu_custom_call.1} parent=23 // pred_check_branch
          %226 = sbr.rel (%p224) target = $region28
        $region27: #{tpu_custom_call.1} parent=23 // pred_region
          %s227 = sand.u32 %s43, 1
          %s228 = scalar_lea.sflag [#allocation4], %s227
          %s229 = sand.u32 %s43, 1
          %s230 = smul.addr %s229, 16
          %s231 = scalar_lea.vmem [#allocation3], %s230
          %233 = vsyncadd %s228, 0
          %s234 = smul.addr %s28, 2
          %s235 = smul.addr %s234, 8
          %s236 = scalar_lea.hbm %s0, %s235
          %s238 = sshll.u32 %s236, 4
          %s239 = int_to_ptr.hbm [resolvable:$true] %s238
          %s240 = sshll.u32 %s231, 4
          %s241 = int_to_ptr.vmem [resolvable:$true] %s240
          %243 = dma.hbm_to_vmem [thread:$0]  %s239, 256, %s241, %s228
        $region28: #{tpu_custom_call.1} parent=23 // pred_fallthru
          _
        // Predicated region
        $region29: #{tpu_custom_call.1} parent=23 // pred_check
          %p244 = pneg %p121
        $region30: #{tpu_custom_call.1} parent=23 // pred_check_branch
          %246 = sbr.rel (%p244) target = $region32
        $region31: #{tpu_custom_call.1} parent=23 // pred_region
          %s247 = sand.u32 %s111, 1
          %s248 = scalar_lea.sflag [#allocation10], %s247
          %s249 = sand.u32 %s111, 1
          %s250 = smul.addr %s249, 128
          %s251 = scalar_lea.vmem [#allocation9], %s250
          %253 = vsyncadd %s248, 0
          %s254 = smul.addr %s29, 4
          %s255 = scalar_lea.hbm %s3, %s254
          %s256 = sshll.u32 %s255, 4
          %s257 = int_to_ptr.hbm [resolvable:$true] %s256
          %s258 = sshll.u32 %s251, 4
          %s259 = int_to_ptr.vmem [resolvable:$true] %s258
          %264 = dma.hbm_to_vmem [thread:$0]  %s257, 2048, %s259, %s248, 128, 64, 4
        $region32: #{tpu_custom_call.1} parent=23 // pred_fallthru
          _
        // Predicated region
        $region33: #{tpu_custom_call.1} parent=23 // pred_check
          %p265 = pneg %p147
        $region34: #{tpu_custom_call.1} parent=23 // pred_check_branch
          %267 = sbr.rel (%p265) target = $region36
        $region35: #{tpu_custom_call.1} parent=23 // pred_region
          %p268 = scmp.lt.s32.totalorder %s29, 1
          %s269 = scalar_select %p268, %s29, 1
          %s270 = scalar_lea.vmem %s4, %s269
        $region36: #{tpu_custom_call.1} parent=23 // pred_fallthru
          _
      $region24: #{tpu_custom_call.1} parent=5 // pred_fallthru
        _
      %p271 = scmp.le.s32.totalorder 1, %s21
      %p272 = scmp.lt.s32.totalorder %s21, 5
      %p273 = pnand %p271, %p272
      %p274 = pneg %p273
      // Predicated region
      $region37: #{tpu_custom_call.1} parent=5 // pred_check
        _
      $region38: #{tpu_custom_call.1} parent=5 // pred_check_branch
        %276 = sbr.rel (%p273) target = $region40
      $region39: #{tpu_custom_call.1} parent=5 // pred_region
        %s277 = ssub.s32 %s21, 1
        %s278 = sand.u32 %s46, 1
        %s279 = scalar_lea.sflag [#allocation4], %s278
        %s280 = sand.u32 %s46, 1
        %s281 = smul.addr %s280, 16
        %s282 = scalar_lea.vmem [#allocation3], %s281
        // Predicated region
        $region41: #{tpu_custom_call.1} parent=39 // pred_check
          %p283 = pneg %p59
        $region42: #{tpu_custom_call.1} parent=39 // pred_check_branch
          %285 = sbr.rel (%p283) target = $region44
        $region43: #{tpu_custom_call.1} parent=39 // pred_region
          %287 = dma.done %s279, 256
        $region44: #{tpu_custom_call.1} parent=39 // pred_fallthru
          _
        // Predicated region
        $region45: #{tpu_custom_call.1} parent=39 // pred_check
          %p288 = pneg %p80
        $region46: #{tpu_custom_call.1} parent=39 // pred_check_branch
          %290 = sbr.rel (%p288) target = $region48
        $region47: #{tpu_custom_call.1} parent=39 // pred_region
          %292 = dma.done [#allocation7], 32
        $region48: #{tpu_custom_call.1} parent=39 // pred_fallthru
          _
        // Predicated region
        $region49: #{tpu_custom_call.1} parent=39 // pred_check
          %p293 = pneg %p101
        $region50: #{tpu_custom_call.1} parent=39 // pred_check_branch
          %295 = sbr.rel (%p293) target = $region52
        $region51: #{tpu_custom_call.1} parent=39 // pred_region
          %297 = dma.done [#allocation7], 32
        $region52: #{tpu_custom_call.1} parent=39 // pred_fallthru
          _
        %s298 = sand.u32 %s114, 1
        %s299 = scalar_lea.sflag [#allocation10], %s298
        %s300 = sand.u32 %s114, 1
        %s301 = smul.addr %s300, 128
        %s302 = scalar_lea.vmem [#allocation9], %s301
        // Predicated region
        $region53: #{tpu_custom_call.1} parent=39 // pred_check
          %p303 = pneg %p127
        $region54: #{tpu_custom_call.1} parent=39 // pred_check_branch
          %305 = sbr.rel (%p303) target = $region56
        $region55: #{tpu_custom_call.1} parent=39 // pred_region
          %307 = dma.done %s299, 2048
        $region56: #{tpu_custom_call.1} parent=39 // pred_fallthru
          _
        %s308 = sand.u32 %s46, 1
        %s309 = scalar_lea.sflag [#allocation4], %s308
        %s310 = sand.u32 %s46, 1
        %s311 = smul.addr %s310, 16
        %s312 = scalar_lea.vmem [#allocation3], %s311
        %p313 = pneg %p59
        %p314 = pneg %p56
        %p315 = pneg %p80
        %p316 = pneg %p77
        %p317 = pneg %p101
        %p318 = pneg %p98
        %s319 = sand.u32 %s114, 1
        %s320 = scalar_lea.sflag [#allocation10], %s319
        %s321 = sand.u32 %s114, 1
        %s322 = smul.addr %s321, 128
        %s323 = scalar_lea.vmem [#allocation9], %s322
        %p324 = pneg %p127
        %p325 = pneg %p124
        %p326 = scmp.lt.s32.totalorder %s31, 1
        %s327 = scalar_select %p326, %s31, 1
        %s328 = scalar_lea.vmem %s4, %s327
        %p329 = pneg %p153
        %p330 = pneg %p150
        %p331 = pneg %p181
        %p332 = pneg %p178
        %s333 = sand.u32 %s168, 1
        %s334 = scalar_lea.sflag [#allocation5], %s333
        %s335 = sand.u32 %s168, 1
        %s336 = smul.addr %s335, 8
        %s337 = scalar_lea.vmem [#allocation11], %s336
        %p338 = scmp.lt.s32.totalorder %s31, 1
        %s339 = scalar_select %p338, %s31, 1
        %s340 = scalar_lea.vmem %s4, %s339
        %p341 = scmp.eq.s32.totalorder %s31, 0
        // Predicated region
        $region57: #{tpu_custom_call.1} parent=39 // pred_check
          %p342 = pneg %p341
        $region58: #{tpu_custom_call.1} parent=39 // pred_check_branch
          %344 = sbr.rel (%p342) target = $region60
        $region59: #{tpu_custom_call.1} parent=39 // pred_region
          %v345 = vld [vmem:[%s282] sm:$0xff]
          %v346 = vld [vmem:[%s282 + $0x8] sm:$0xff]
          %v347 = vadd.f32 %v345, %v346
          %348 = vadd.xlane.f32.xlu0 %v347
          %v349 = vpop.xlane.xlu0 %348
          %v350 = vmul.f32 %v345, %v345
          %v351 = vmul.f32 %v346, %v346
          %v352 = vadd.f32 %v350, %v351
          %353 = vadd.xlane.f32.xlu0 %v352
          %v354 = vpop.xlane.xlu0 %353
          %v355 = vmul.f32 %v349, 0.00390625
          %v356 = vmul.f32 %v355, 256.0
          %v357 = vmul.f32 %v356, %v355
          %v358 = vsub.f32 %v354, %v357
          %v359 = vmul.f32 %v358, 0.003921569
          %v360 = vmax.f32 %v359, 0.0
          %v361 = vrsqrt.pop %v360
          %v362 = vmul.f32 %v361, %v360
          %v363 = vmul.f32 %v362, %v361
          %v364 = vmul.f32 0.5, %v363
          %v365 = vsub.f32 1.5, %v364
          %v366 = vmul.f32 %v361, %v365
          %v367 = vmul.f32 %v360, %v366
          %vm368 = vcmp.eq.f32.partialorder %v360, inf
          %v369 = vsel %vm368, %v360, %v367
          %vm370 = vcmp.eq.f32.partialorder %v360, 0.0
          %v371 = vand.u32 %v360, 2147483648
          %v372 = vsel %vm370, %v371, %v369
          %v373 = vadd.f32 %v372, 1e-06
          %v374 = vrcp.pop %v373
          %v375 = vmul.f32 %v373, %v374
          %v376 = vsub.f32 1.0, %v375
          %v377 = vmul.f32 %v374, %v376
          %v378 = vadd.f32 %v374, %v377
          %vm379 = vweird.f32 %v373
          %vm380 = vweird.f32 %v374
          %vm381 = vmor %vm379, %vm380
          %v382 = vsel %vm381, %v374, %v378
          %v383 = vand.u32 2147483647, %v373
          %vm384 = vcmp.eq.f32.partialorder %v383, 8.507059e+37
          %v385 = vand.u32 %v373, 2147483648
          %v386 = vor.u32 1.1754944e-38, %v385
          %v387 = vsel %vm384, %v386, %v382
          %v388 = vmul.f32 1.0, %v387
          %v389 = vld [vmem:[#allocation6] sm:$0x3]
          %v390 = vsub.f32 %v345, %v355
          %v391 = vsub.f32 %v346, %v355
          %v392 = vmul.f32 %v390, %v388
          %v393 = vmul.f32 %v391, %v388
          %v395 = vperm.slane %v389, 0
          %v396 = vperm.slane %v389, 1
          %v399 = vmul.f32 %v395, %v392
          %v400 = vmul.f32 %v396, %v393
          %v401 = vld [vmem:[#allocation8] sm:$0x3]
          %v403 = vperm.slane %v401, 0
          %v404 = vperm.slane %v401, 1
          %v407 = vadd.f32 %v399, %v403
          %v408 = vadd.f32 %v400, %v404
          %v409 = vpack.c.bf16 %v408, %v407
          %410 = vst [vmem:[#allocation2] sm:$0xff] %v409
        $region60: #{tpu_custom_call.1} parent=39 // pred_fallthru
          _
        %v411 = vld [vmem:[#allocation2] sm:$0xff]
        %v412 = vld [vmem:[%s302] sm:$0xf]
        %v413 = vld [vmem:[%s302 + $0x4] sm:$0xf]
        %v414 = vld [vmem:[%s302 + $0x8] sm:$0xf]
        %v415 = vld [vmem:[%s302 + $0xc] sm:$0xf]
        %v416 = vld [vmem:[%s302 + $0x10] sm:$0xf]
        %v417 = vld [vmem:[%s302 + $0x14] sm:$0xf]
        %v418 = vld [vmem:[%s302 + $0x18] sm:$0xf]
        %v419 = vld [vmem:[%s302 + $0x1c] sm:$0xf]
        %v420 = vld [vmem:[%s302 + $0x20] sm:$0xf]
        %v421 = vld [vmem:[%s302 + $0x24] sm:$0xf]
        %v422 = vld [vmem:[%s302 + $0x28] sm:$0xf]
        %v423 = vld [vmem:[%s302 + $0x2c] sm:$0xf]
        %v424 = vld [vmem:[%s302 + $0x30] sm:$0xf]
        %v425 = vld [vmem:[%s302 + $0x34] sm:$0xf]
        %v426 = vld [vmem:[%s302 + $0x38] sm:$0xf]
        %v427 = vld [vmem:[%s302 + $0x3c] sm:$0xf]
        %v428 = vld [vmem:[%s302 + $0x40] sm:$0xf]
        %v429 = vld [vmem:[%s302 + $0x44] sm:$0xf]
        %v430 = vld [vmem:[%s302 + $0x48] sm:$0xf]
        %v431 = vld [vmem:[%s302 + $0x4c] sm:$0xf]
        %v432 = vld [vmem:[%s302 + $0x50] sm:$0xf]
        %v433 = vld [vmem:[%s302 + $0x54] sm:$0xf]
        %v434 = vld [vmem:[%s302 + $0x58] sm:$0xf]
        %v435 = vld [vmem:[%s302 + $0x5c] sm:$0xf]
        %v436 = vld [vmem:[%s302 + $0x60] sm:$0xf]
        %v437 = vld [vmem:[%s302 + $0x64] sm:$0xf]
        %v438 = vld [vmem:[%s302 + $0x68] sm:$0xf]
        %v439 = vld [vmem:[%s302 + $0x6c] sm:$0xf]
        %v440 = vld [vmem:[%s302 + $0x70] sm:$0xf]
        %v441 = vld [vmem:[%s302 + $0x74] sm:$0xf]
        %v442 = vld [vmem:[%s302 + $0x78] sm:$0xf]
        %v443 = vld [vmem:[%s302 + $0x7c] sm:$0xf]
        %v444 = vld [vmem:[%s340] sm:$0x1]
        %v446 = vperm.slane %v444, 0
        %v449 = vunpack.c.l.b16 %v411
        %v450 = vunpack.c.h.b16 %v411
        %v451 = vpack.c.b16 %v449, %v449
        %v452 = vpack.c.b16 %v450, %v450
        %v487 = vunpack.c.l.b16 %v412
        %v488 = vunpack.c.l.b16 %v413
        %v489 = vunpack.c.l.b16 %v414
        %v490 = vunpack.c.l.b16 %v415
        %v491 = vunpack.c.l.b16 %v416
        %v492 = vunpack.c.l.b16 %v417
        %v493 = vunpack.c.l.b16 %v418
        %v494 = vunpack.c.l.b16 %v419
        %v495 = vunpack.c.l.b16 %v420
        %v496 = vunpack.c.l.b16 %v421
        %v497 = vunpack.c.l.b16 %v422
        %v498 = vunpack.c.l.b16 %v423
        %v499 = vunpack.c.l.b16 %v424
        %v500 = vunpack.c.l.b16 %v425
        %v501 = vunpack.c.l.b16 %v426
        %v502 = vunpack.c.l.b16 %v427
        %v503 = vunpack.c.l.b16 %v428
        %v504 = vunpack.c.l.b16 %v429
        %v505 = vunpack.c.l.b16 %v430
        %v506 = vunpack.c.l.b16 %v431
        %v507 = vunpack.c.l.b16 %v432
        %v508 = vunpack.c.l.b16 %v433
        %v509 = vunpack.c.l.b16 %v434
        %v510 = vunpack.c.l.b16 %v435
        %v511 = vunpack.c.l.b16 %v436
        %v512 = vunpack.c.l.b16 %v437
        %v513 = vunpack.c.l.b16 %v438
        %v514 = vunpack.c.l.b16 %v439
        %v515 = vunpack.c.l.b16 %v440
        %v516 = vunpack.c.l.b16 %v441
        %v517 = vunpack.c.l.b16 %v442
        %v518 = vunpack.c.l.b16 %v443
        %v519 = vpack.c.b16 %v488, %v487
        %v520 = vpack.c.b16 %v490, %v489
        %v521 = vpack.c.b16 %v492, %v491
        %v522 = vpack.c.b16 %v494, %v493
        %v523 = vpack.c.b16 %v496, %v495
        %v524 = vpack.c.b16 %v498, %v497
        %v525 = vpack.c.b16 %v500, %v499
        %v526 = vpack.c.b16 %v502, %v501
        %v527 = vpack.c.b16 %v504, %v503
        %v528 = vpack.c.b16 %v506, %v505
        %v529 = vpack.c.b16 %v508, %v507
        %v530 = vpack.c.b16 %v510, %v509
        %v531 = vpack.c.b16 %v512, %v511
        %v532 = vpack.c.b16 %v514, %v513
        %v533 = vpack.c.b16 %v516, %v515
        %v534 = vpack.c.b16 %v518, %v517
        %551 = vmatpush.bf16.msra.mxu0 %v526
        %552 = vmatpush.bf16.msra.mxu0 %v525
        %553 = vmatpush.bf16.msra.mxu0 %v524
        %554 = vmatpush.bf16.msra.mxu0 %v523
        %555 = vmatpush.bf16.msra.mxu0 %v522
        %556 = vmatpush.bf16.msra.mxu0 %v521
        %557 = vmatpush.bf16.msra.mxu0 %v520
        %558 = vmatpush.bf16.msra.mxu0 %v519
        %559 = vmatmul.bf16.gmra.mxu0 %v451
        %v560 = vpop.f32.mrf.mxu0
        %v561 = vadd.f32 %v446, %v560
        %v562 = vpop.f32.mrf.mxu0
        %563 = vdwg.mxu0
        %564 = vmatpush.bf16.msra.mxu0 %v534
        %565 = vmatpush.bf16.msra.mxu0 %v533
        %566 = vmatpush.bf16.msra.mxu0 %v532
        %567 = vmatpush.bf16.msra.mxu0 %v531
        %568 = vmatpush.bf16.msra.mxu0 %v530
        %569 = vmatpush.bf16.msra.mxu0 %v529
        %570 = vmatpush.bf16.msra.mxu0 %v528
        %571 = vmatpush.bf16.msra.mxu0 %v527
        %572 = vmatmul.bf16.gmra.mxu0 %v452
        %v573 = vpop.f32.mrf.mxu0
        %v574 = vadd.f32 %v561, %v573
        %v575 = vpop.f32.mrf.mxu0
        %576 = vdwg.mxu0
        %s577 = smul.u32 %s31, 128
        %s578 = sshra.s32 %s577, 7
        %s579 = sand.u32 %s577, 127
        %s580 = smul.addr %s578, 8
        %s581 = scalar_lea.vmem %s282, %s580 [#allocation3]
        %v582 = vld [vmem:[%s581] sm:$0xff]
        %v583 = vadd.f32 %v582, %v574
        %584 = vst [vmem:[%s337] sm:$0xff] %v583
        %s585 = sand.u32 %s168, 1
        %s586 = scalar_lea.sflag [#allocation5], %s585
        %s587 = sand.u32 %s168, 1
        %s588 = smul.addr %s587, 8
        %s589 = scalar_lea.vmem [#allocation11], %s588
        // Predicated region
        $region61: #{tpu_custom_call.1} parent=39 // pred_check
          %p590 = pneg %p178
        $region62: #{tpu_custom_call.1} parent=39 // pred_check_branch
          %592 = sbr.rel (%p590) target = $region64
        $region63: #{tpu_custom_call.1} parent=39 // pred_region
          %594 = vsyncadd %s586, 0
          %s595 = smul.addr %s30, 2
          %s596 = sadd.s32 %s31, %s595
          %s597 = smul.addr %s596, 8
          %s598 = scalar_lea.hbm %s5, %s597
          %s600 = sshll.u32 %s589, 4
          %s601 = int_to_ptr.vmem [resolvable:$true] %s600
          %s602 = sshll.u32 %s598, 4
          %s603 = int_to_ptr.hbm [resolvable:$true] %s602
          %605 = dma.vmem_to_hbm [thread:$0]  %s601, 128, %s603, %s586
        $region64: #{tpu_custom_call.1} parent=39 // pred_fallthru
          _
      $region40: #{tpu_custom_call.1} parent=5 // pred_fallthru
        _
      %p606 = scmp.le.s32.totalorder 2, %s21
      // Predicated region
      $region65: #{tpu_custom_call.1} parent=5 // pred_check
        %p607 = pneg %p606
      $region66: #{tpu_custom_call.1} parent=5 // pred_check_branch
        %609 = sbr.rel (%p607) target = $region68
      $region67: #{tpu_custom_call.1} parent=5 // pred_region
        %s610 = ssub.s32 %s21, 2
        // Predicated region
        $region69: #{tpu_custom_call.1} parent=67 // pred_check
          %p611 = pneg %p184
        $region70: #{tpu_custom_call.1} parent=67 // pred_check_branch
          %613 = sbr.rel (%p611) target = $region72
        $region71: #{tpu_custom_call.1} parent=67 // pred_region
          %s614 = sand.u32 %s169, 1
          %s615 = scalar_lea.sflag [#allocation5], %s614
          %s616 = sand.u32 %s169, 1
          %s617 = smul.addr %s616, 8
          %s618 = scalar_lea.vmem [#allocation11], %s617
          %620 = dma.done %s615, 128
        $region72: #{tpu_custom_call.1} parent=67 // pred_fallthru
          _
      $region68: #{tpu_custom_call.1} parent=5 // pred_fallthru
        _
    $region6: #{tpu_custom_call.1} parent=1 // loop_footer
      %s25 = sadd.s32 1, %s21
    $region7: #{tpu_custom_call.1} parent=1 // loop_footer_branch
      %20 = sbr.rel target = $region3
    $region8: #{tpu_custom_call.1} parent=1 // loop_exit
      _
    %621 = vsyncpa [#allocation4], 1
    %s622 = scalar_lea.sflag [#allocation4], 1
    %623 = vsyncpa %s622, 1
    %624 = vsyncpa [#allocation7], 1
    %625 = vsyncpa [#allocation10], 1
    %s626 = scalar_lea.sflag [#allocation10], 1
    %627 = vsyncpa %s626, 1
    %628 = vsyncpa [#allocation5], 1
    %s629 = scalar_lea.sflag [#allocation5], 1
    %630 = vsyncpa %s629, 1

</llo_original>
